<compile_context>
chip_gen: v5e
topology: v5e:2x2
jax: 0.10.0
libtpu: 0.0.40
codegen_flags: <defaults>
</compile_context>

<pallas_src>
import functools

import jax
import jax.numpy as jnp
from jax.experimental import pallas as pl
from jax.experimental.pallas import tpu as pltpu


LANE = 128  # lane width: class dim is padded to this for dense stores


# ------------------------------ fused kernel -------------------------------

def _mddnet_kernel(x_ref, bbw_ref, bbb_ref, bnw_ref, bnb_ref,
                   w1_ref, b1_ref, w2_ref, b2_ref,
                   feat_ref, out_ref, sm_ref, adv1_ref, adv2_ref, adv3_ref,
                   *, size_1, size_2, size_3, class_num):
    # ---- backbone stub: GAP folded into bbw -> one K = C*HW contraction ----
    feats = jnp.dot(x_ref[...], bbw_ref[...],
                    preferred_element_type=jnp.float32) + bbb_ref[...]

    # ---- bottleneck: Linear (+ folded BatchNorm eval) -> ReLU (Dropout = id) ----
    f = jnp.dot(feats, bnw_ref[...],
                preferred_element_type=jnp.float32) + bnb_ref[...]
    f = jnp.maximum(f, 0.0)
    feat_ref[...] = f.astype(feat_ref.dtype)

    def head(h):
        # Linear -> ReLU -> Dropout(identity) -> Linear  (class dim padded to LANE)
        hid = jnp.dot(f, w1_ref[h], preferred_element_type=jnp.float32)
        hid = jnp.maximum(hid + b1_ref[h:h + 1, :], 0.0)
        out = jnp.dot(hid, w2_ref[h], preferred_element_type=jnp.float32)
        return out + b2_ref[h:h + 1, :]

    # ---- main classifier + softmax ----
    logits = head(0)                                     # [B, LANE]
    out_ref[...] = logits.astype(out_ref.dtype)
    col = jax.lax.broadcasted_iota(jnp.int32, logits.shape, 1)
    masked = jnp.where(col < class_num, logits, -jnp.inf)
    m = jnp.max(masked, axis=1, keepdims=True)
    e = jnp.exp(masked - m)
    inv = pl.reciprocal(jnp.sum(e, axis=1, keepdims=True), approx=True)
    sm_ref[...] = (e * inv).astype(sm_ref.dtype)

    # ---- adversarial heads (GRL forward == identity) ----
    n1 = size_1 + size_2
    nB = size_1 + size_2 + size_3

    adv1 = head(1)                                       # rows [0 : s1+s2]
    adv1_ref[...] = adv1[0:n1].astype(adv1_ref.dtype)

    adv2 = head(2)                                       # rows [0:s1] ++ [s1+s2 : B]
    adv2_ref[pl.ds(0, size_1), :] = adv2[0:size_1].astype(adv2_ref.dtype)
    adv2_ref[pl.ds(size_1, size_3), :] = adv2[n1:nB].astype(adv2_ref.dtype)

    adv3 = head(3)                                       # rows [s1 : B]
    adv3_ref[...] = adv3[size_1:nB].astype(adv3_ref.dtype)


# ----------------------------- pallas_call glue ----------------------------

def _full_spec(shape):
    # Whole-array block (single grid point); block dims == array dims so the
    # (8,128) divisibility rule is satisfied via the full-dim exemption.
    n = len(shape)
    return pl.BlockSpec(shape, lambda i, _n=n: (0,) * _n)


def mddnet_fused(x_flat, pp, size_1, size_2, size_3, class_num):
    B = x_flat.shape[0]
    D = pp["bn_w"].shape[1]
    NP = pp["w2"].shape[-1]
    n1, n2, n3 = size_1 + size_2, size_1 + size_3, size_2 + size_3

    inputs = [x_flat, pp["bb_w"], pp["bb_b"], pp["bn_w"], pp["bn_b"],
              pp["w1"], pp["b1"], pp["w2"], pp["b2"]]
    out_shapes = (
        jax.ShapeDtypeStruct((B, D), jnp.float32),    # features
        jax.ShapeDtypeStruct((B, NP), jnp.float32),   # logits (padded)
        jax.ShapeDtypeStruct((B, NP), jnp.float32),   # softmax (padded)
        jax.ShapeDtypeStruct((n1, NP), jnp.float32),  # adv_1 (padded)
        jax.ShapeDtypeStruct((n2, NP), jnp.float32),  # adv_2 (padded)
        jax.ShapeDtypeStruct((n3, NP), jnp.float32),  # adv_3 (padded)
    )
    kernel = functools.partial(_mddnet_kernel, size_1=size_1, size_2=size_2,
                               size_3=size_3, class_num=class_num)
    return pl.pallas_call(
        kernel,
        grid=(1,),
        in_specs=[_full_spec(a.shape) for a in inputs],
        out_specs=[_full_spec(s.shape) for s in out_shapes],
        out_shape=out_shapes,
        compiler_params=pltpu.CompilerParams(
            dimension_semantics=("arbitrary",)),
    )(*inputs)


# ------------------------------ parameters ---------------------------------

def init_params(key, in_channels=4, base_feat=32, bottleneck_dim=128,
                width=128, class_num=31):
    """Raw params mirroring the PyTorch init (eval-mode BN/Dropout)."""
    ks = jax.random.split(key, 16)
    p = {}
    # backbone stub (GAP + Linear)
    p["bb_w"] = (jax.random.normal(ks[0], (in_channels, base_feat)) * 0.02
                 ).astype(jnp.float32)
    p["bb_b"] = jnp.zeros((1, base_feat), jnp.float32)
    # bottleneck: Linear, weight ~ N(0, 0.005), bias 0.1
    p["bn_w"] = (jax.random.normal(ks[1], (base_feat, bottleneck_dim)) * 0.005
                 ).astype(jnp.float32)
    p["bn_b"] = jnp.full((1, bottleneck_dim), 0.1, jnp.float32)
    # BatchNorm1d defaults (eval mode)
    p["bn_gamma"] = jnp.ones((1, bottleneck_dim), jnp.float32)
    p["bn_beta"] = jnp.zeros((1, bottleneck_dim), jnp.float32)
    p["bn_mean"] = jnp.zeros((1, bottleneck_dim), jnp.float32)
    p["bn_var"] = jnp.ones((1, bottleneck_dim), jnp.float32)

    # classifier heads: weights ~ N(0, 0.01), biases 0.0
    def head(k1, k2):
        return dict(
            w1=(jax.random.normal(k1, (bottleneck_dim, width)) * 0.01
                ).astype(jnp.float32),
            b1=jnp.zeros((1, width), jnp.float32),
            w2=(jax.random.normal(k2, (width, class_num)) * 0.01
                ).astype(jnp.float32),
            b2=jnp.zeros((1, class_num), jnp.float32),
        )
    p["cls"] = head(ks[2], ks[3])
    p["cls_2_1"] = head(ks[4], ks[5])
    p["cls_2_2"] = head(ks[6], ks[7])
    p["cls_2_3"] = head(ks[8], ks[9])
    return p


def prepare_params(p, hw, class_num, eps=1e-5):
    """Fold GAP into the backbone weight, fold BN-eval into the bottleneck
    Linear, stack the four heads and pad the class dim to LANE columns."""
    # GAP fold: x[B, C*HW] @ (bb_w tiled over HW / HW) == mean-pool then Linear.
    bb_w_big = jnp.repeat(p["bb_w"], hw, axis=0) / float(hw)   # [C*HW, F]

    # BN-eval fold: y = (x@W + b - mean) * gamma/rsqrt -> x@W' + b'
    scale = p["bn_gamma"] * jax.lax.rsqrt(p["bn_var"] + eps)   # [1, D]
    bn_w = p["bn_w"] * scale                                   # [F, D]
    bn_b = (p["bn_b"] - p["bn_mean"]) * scale + p["bn_beta"]   # [1, D]

    heads = [p["cls"], p["cls_2_1"], p["cls_2_2"], p["cls_2_3"]]
    pad = LANE - class_num

    def pad_cols(a):
        return jnp.pad(a, ((0, 0), (0, pad)))

    w1 = jnp.stack([h["w1"] for h in heads])                   # [4, D, W]
    b1 = jnp.stack([h["b1"][0] for h in heads])                # [4, W]
    w2 = jnp.stack([pad_cols(h["w2"]) for h in heads])         # [4, W, LANE]
    b2 = jnp.stack([pad_cols(h["b2"])[0] for h in heads])      # [4, LANE]

    return dict(bb_w=bb_w_big, bb_b=p["bb_b"], bn_w=bn_w, bn_b=bn_b,
                w1=w1, b1=b1, w2=w2, b2=b2)


# ------------------------------- MDDNet model -------------------------------

@functools.partial(jax.jit,
                   static_argnames=("size_1", "size_2", "size_3", "class_num"))
def mddnet_forward(prepared, inputs, size_1, size_2, size_3, class_num=31):
    """Mirrors MDDNet.forward (eval mode)."""
    B, C, H, W = inputs.shape
    x_flat = inputs.reshape(B, C * H * W)
    feat, out_p, sm_p, a1_p, a2_p, a3_p = mddnet_fused(
        x_flat, prepared, size_1, size_2, size_3, class_num)
    # Strip the lane padding back to class_num columns.
    return (feat,
            out_p[:, :class_num], sm_p[:, :class_num],
            a1_p[:, :class_num], a2_p[:, :class_num], a3_p[:, :class_num])


# -------------------------- pure-JAX reference ------------------------------

def reference_forward(p, x, size_1, size_2, size_3):
    B, C, H, W = x.shape
    pooled = x.reshape(B, C, H * W).mean(axis=-1)
    feats = pooled @ p["bb_w"] + p["bb_b"]
    y = feats @ p["bn_w"] + p["bn_b"]
    y = ((y - p["bn_mean"]) * jax.lax.rsqrt(p["bn_var"] + 1e-5)
         * p["bn_gamma"] + p["bn_beta"])
    f = jnp.maximum(y, 0.0)

    def head(h, z):
        hid = jnp.maximum(z @ h["w1"] + h["b1"], 0.0)
        return hid @ h["w2"] + h["b2"]

    f1 = f[:size_1]
    f2 = f[size_1:size_1 + size_2]
    f3 = f[size_1 + size_2:size_1 + size_2 + size_3]
    out = head(p["cls"], f)
    sm = jax.nn.softmax(out, axis=1)
    o1 = head(p["cls_2_1"], jnp.concatenate([f1, f2], axis=0))
    o2 = head(p["cls_2_2"], jnp.concatenate([f1, f3], axis=0))
    o3 = head(p["cls_2_3"], jnp.concatenate([f2, f3], axis=0))
    return f, out, sm, o1, o2, o3


# ---------------------------------- main ------------------------------------

if __name__ == "__main__":
    key = jax.random.PRNGKey(0)
    k_in, k_param = jax.random.split(key)

    # small shapes: batch split into 3 domains (size_1 + size_2 + size_3 = B)
    size_1, size_2, size_3 = 2, 3, 3
    B, C, H, W = size_1 + size_2 + size_3, 4, 16, 16
    class_num = 31

    x = jax.random.normal(k_in, (B, C, H, W), jnp.float32)   # NCHW
    raw = init_params(k_param, in_channels=C, base_feat=32,
                      bottleneck_dim=128, width=128, class_num=class_num)
    prepared = prepare_params(raw, hw=H * W, class_num=class_num)

    outs = mddnet_forward(prepared, x, size_1, size_2, size_3, class_num)
    outs = jax.block_until_ready(outs)

    features, outputs, softmax_outputs, o1, o2, o3 = outs
    assert features.shape == (B, 128)
    assert outputs.shape == (B, class_num)
    assert softmax_outputs.shape == (B, class_num)
    assert o1.shape == (size_1 + size_2, class_num)
    assert o2.shape == (size_1 + size_3, class_num)
    assert o3.shape == (size_2 + size_3, class_num)

    # numerical check vs an un-folded pure-JAX reference
    ref = reference_forward(raw, x, size_1, size_2, size_3)
    names = ["features", "outputs", "softmax", "adv1", "adv2", "adv3"]
    for name, got, want in zip(names, outs, ref):
        assert jnp.allclose(got, want, atol=2e-3, rtol=2e-3), (
            name, float(jnp.max(jnp.abs(got - want))))

    print("KERNEL_OK")
</pallas_src>

<mosaic_0001>
module attributes {stable_mosaic.version = 11 : i64} {
  func.func @_mddnet_kernel(%arg0: i32, %arg1: memref<8x1024xf32, #tpu.memory_space<vmem>>, %arg2: memref<1024x32xf32, #tpu.memory_space<vmem>>, %arg3: memref<1x32xf32, #tpu.memory_space<vmem>>, %arg4: memref<32x128xf32, #tpu.memory_space<vmem>>, %arg5: memref<1x128xf32, #tpu.memory_space<vmem>>, %arg6: memref<4x128x128xf32, #tpu.memory_space<vmem>>, %arg7: memref<4x128xf32, #tpu.memory_space<vmem>>, %arg8: memref<4x128x128xf32, #tpu.memory_space<vmem>>, %arg9: memref<4x128xf32, #tpu.memory_space<vmem>>, %arg10: memref<8x128xf32, #tpu.memory_space<vmem>>, %arg11: memref<8x128xf32, #tpu.memory_space<vmem>>, %arg12: memref<8x128xf32, #tpu.memory_space<vmem>>, %arg13: memref<5x128xf32, #tpu.memory_space<vmem>>, %arg14: memref<5x128xf32, #tpu.memory_space<vmem>>, %arg15: memref<6x128xf32, #tpu.memory_space<vmem>>) attributes {dimension_semantics = [#tpu.dimension_semantics<arbitrary>], iteration_bounds = array<i64: 1>, scalar_prefetch = 0 : i64, scratch_operands = 0 : i64, tpu.core_type = #tpu.core_type<tc>, window_params = [{pipeline_mode = #tpu.pipeline_mode<synchronous>, transform_indices = @transform_0, window_bounds = array<i64: 8, 1024>}, {pipeline_mode = #tpu.pipeline_mode<synchronous>, transform_indices = @transform_1, window_bounds = array<i64: 1024, 32>}, {pipeline_mode = #tpu.pipeline_mode<synchronous>, transform_indices = @transform_2, window_bounds = array<i64: 1, 32>}, {pipeline_mode = #tpu.pipeline_mode<synchronous>, transform_indices = @transform_3, window_bounds = array<i64: 32, 128>}, {pipeline_mode = #tpu.pipeline_mode<synchronous>, transform_indices = @transform_4, window_bounds = array<i64: 1, 128>}, {pipeline_mode = #tpu.pipeline_mode<synchronous>, transform_indices = @transform_5, window_bounds = array<i64: 4, 128, 128>}, {pipeline_mode = #tpu.pipeline_mode<synchronous>, transform_indices = @transform_6, window_bounds = array<i64: 4, 128>}, {pipeline_mode = #tpu.pipeline_mode<synchronous>, transform_indices = @transform_7, window_bounds = array<i64: 4, 128, 128>}, {pipeline_mode = #tpu.pipeline_mode<synchronous>, transform_indices = @transform_8, window_bounds = array<i64: 4, 128>}, {pipeline_mode = #tpu.pipeline_mode<synchronous>, transform_indices = @transform_9, window_bounds = array<i64: 8, 128>}, {pipeline_mode = #tpu.pipeline_mode<synchronous>, transform_indices = @transform_10, window_bounds = array<i64: 8, 128>}, {pipeline_mode = #tpu.pipeline_mode<synchronous>, transform_indices = @transform_11, window_bounds = array<i64: 8, 128>}, {pipeline_mode = #tpu.pipeline_mode<synchronous>, transform_indices = @transform_12, window_bounds = array<i64: 5, 128>}, {pipeline_mode = #tpu.pipeline_mode<synchronous>, transform_indices = @transform_13, window_bounds = array<i64: 5, 128>}, {pipeline_mode = #tpu.pipeline_mode<synchronous>, transform_indices = @transform_14, window_bounds = array<i64: 6, 128>}]} {
    %c0 = arith.constant 0 : index
    %c0_0 = arith.constant 0 : index
    %0 = vector.load %arg1[%c0, %c0_0] : memref<8x1024xf32, #tpu.memory_space<vmem>>, vector<8x1024xf32>
    %c0_1 = arith.constant 0 : index
    %c0_2 = arith.constant 0 : index
    %1 = vector.load %arg2[%c0_1, %c0_2] : memref<1024x32xf32, #tpu.memory_space<vmem>>, vector<1024x32xf32>
    %cst = arith.constant dense<0.000000e+00> : vector<8x32xf32>
    %2 = tpu.matmul %0, %1, %cst {dimension_numbers = #tpu.dot_dimension_numbers<[1], [0], [0], [1], [0, 0, 1, 1], [], []>} : vector<8x1024xf32>, vector<1024x32xf32>, vector<8x32xf32> -> vector<8x32xf32>
    %c0_3 = arith.constant 0 : index
    %c0_4 = arith.constant 0 : index
    %3 = vector.load %arg3[%c0_3, %c0_4] : memref<1x32xf32, #tpu.memory_space<vmem>>, vector<1x32xf32>
    %4 = vector.broadcast %3 : vector<1x32xf32> to vector<8x32xf32>
    %5 = arith.addf %2, %4 : vector<8x32xf32>
    %c0_5 = arith.constant 0 : index
    %c0_6 = arith.constant 0 : index
    %6 = vector.load %arg4[%c0_5, %c0_6] : memref<32x128xf32, #tpu.memory_space<vmem>>, vector<32x128xf32>
    %cst_7 = arith.constant dense<0.000000e+00> : vector<8x128xf32>
    %7 = tpu.matmul %5, %6, %cst_7 {dimension_numbers = #tpu.dot_dimension_numbers<[1], [0], [0], [1], [0, 0, 1, 1], [], []>} : vector<8x32xf32>, vector<32x128xf32>, vector<8x128xf32> -> vector<8x128xf32>
    %c0_8 = arith.constant 0 : index
    %c0_9 = arith.constant 0 : index
    %8 = vector.load %arg5[%c0_8, %c0_9] : memref<1x128xf32, #tpu.memory_space<vmem>>, vector<1x128xf32>
    %9 = vector.broadcast %8 : vector<1x128xf32> to vector<8x128xf32>
    %10 = arith.addf %7, %9 : vector<8x128xf32>
    %cst_10 = arith.constant 0.000000e+00 : f32
    %11 = vector.broadcast %cst_10 : f32 to vector<8x128xf32>
    %12 = arith.maximumf %10, %11 : vector<8x128xf32>
    %c0_11 = arith.constant 0 : index
    %c0_12 = arith.constant 0 : index
    %13 = vector.load %arg10[%c0_11, %c0_12] : memref<8x128xf32, #tpu.memory_space<vmem>>, vector<8x128xf32>
    tpu.vector_store %arg10[%c0_11, %c0_12], %12 {strides = array<i32>} : memref<8x128xf32, #tpu.memory_space<vmem>>, vector<8x128xf32>,
    %c0_13 = arith.constant 0 : index
    %c0_14 = arith.constant 0 : index
    %c0_15 = arith.constant 0 : index
    %14 = vector.load %arg6[%c0_13, %c0_14, %c0_15] : memref<4x128x128xf32, #tpu.memory_space<vmem>>, vector<1x128x128xf32>
    %15 = vector.shape_cast %14 : vector<1x128x128xf32> to vector<128x128xf32>
    %cst_16 = arith.constant dense<0.000000e+00> : vector<8x128xf32>
    %16 = tpu.matmul %12, %15, %cst_16 {dimension_numbers = #tpu.dot_dimension_numbers<[1], [0], [0], [1], [0, 0, 1, 1], [], []>} : vector<8x128xf32>, vector<128x128xf32>, vector<8x128xf32> -> vector<8x128xf32>
    %c0_17 = arith.constant 0 : index
    %c0_18 = arith.constant 0 : index
    %17 = vector.load %arg7[%c0_17, %c0_18] : memref<4x128xf32, #tpu.memory_space<vmem>>, vector<1x128xf32>
    %18 = vector.broadcast %17 : vector<1x128xf32> to vector<8x128xf32>
    %19 = arith.addf %16, %18 : vector<8x128xf32>
    %cst_19 = arith.constant 0.000000e+00 : f32
    %20 = vector.broadcast %cst_19 : f32 to vector<8x128xf32>
    %21 = arith.maximumf %19, %20 : vector<8x128xf32>
    %c0_20 = arith.constant 0 : index
    %c0_21 = arith.constant 0 : index
    %c0_22 = arith.constant 0 : index
    %22 = vector.load %arg8[%c0_20, %c0_21, %c0_22] : memref<4x128x128xf32, #tpu.memory_space<vmem>>, vector<1x128x128xf32>
    %23 = vector.shape_cast %22 : vector<1x128x128xf32> to vector<128x128xf32>
    %cst_23 = arith.constant dense<0.000000e+00> : vector<8x128xf32>
    %24 = tpu.matmul %21, %23, %cst_23 {dimension_numbers = #tpu.dot_dimension_numbers<[1], [0], [0], [1], [0, 0, 1, 1], [], []>} : vector<8x128xf32>, vector<128x128xf32>, vector<8x128xf32> -> vector<8x128xf32>
    %c0_24 = arith.constant 0 : index
    %c0_25 = arith.constant 0 : index
    %25 = vector.load %arg9[%c0_24, %c0_25] : memref<4x128xf32, #tpu.memory_space<vmem>>, vector<1x128xf32>
    %26 = vector.broadcast %25 : vector<1x128xf32> to vector<8x128xf32>
    %27 = arith.addf %24, %26 : vector<8x128xf32>
    %c0_26 = arith.constant 0 : index
    %c0_27 = arith.constant 0 : index
    %28 = vector.load %arg11[%c0_26, %c0_27] : memref<8x128xf32, #tpu.memory_space<vmem>>, vector<8x128xf32>
    tpu.vector_store %arg11[%c0_26, %c0_27], %27 {strides = array<i32>} : memref<8x128xf32, #tpu.memory_space<vmem>>, vector<8x128xf32>,
    %29 = tpu.iota {dimensions = array<i32: 1>} : vector<8x128xi32>
    %c31_i32 = arith.constant 31 : i32
    %30 = vector.broadcast %c31_i32 : i32 to vector<8x128xi32>
    %31 = arith.cmpi slt, %29, %30 : vector<8x128xi32>
    %cst_28 = arith.constant 0xFF800000 : f32
    %32 = vector.broadcast %cst_28 : f32 to vector<8x128xf32>
    %33 = arith.select %31, %27, %32 : vector<8x128xi1>, vector<8x128xf32>
    %cst_29 = arith.constant dense<0xFF800000> : vector<8xf32>
    %34 = vector.multi_reduction <maximumf>, %33, %cst_29 [1] : vector<8x128xf32> to vector<8xf32>
    %35 = vector.shape_cast %34 : vector<8xf32> to vector<8x1xf32>
    %36 = vector.broadcast %35 : vector<8x1xf32> to vector<8x128xf32>
    %37 = arith.subf %33, %36 : vector<8x128xf32>
    %38 = math.exp %37 : vector<8x128xf32>
    %cst_30 = arith.constant dense<0.000000e+00> : vector<8xf32>
    %39 = vector.multi_reduction <add>, %38, %cst_30 [1] : vector<8x128xf32> to vector<8xf32>
    %40 = vector.shape_cast %39 : vector<8xf32> to vector<8x1xf32>
    %41 = tpu.reciprocal %40 {approx = true} : vector<8x1xf32> -> vector<8x1xf32>
    %42 = vector.broadcast %41 : vector<8x1xf32> to vector<8x128xf32>
    %43 = arith.mulf %38, %42 : vector<8x128xf32>
    %c0_31 = arith.constant 0 : index
    %c0_32 = arith.constant 0 : index
    %44 = vector.load %arg12[%c0_31, %c0_32] : memref<8x128xf32, #tpu.memory_space<vmem>>, vector<8x128xf32>
    tpu.vector_store %arg12[%c0_31, %c0_32], %43 {strides = array<i32>} : memref<8x128xf32, #tpu.memory_space<vmem>>, vector<8x128xf32>,
    %c1 = arith.constant 1 : index
    %c0_33 = arith.constant 0 : index
    %c0_34 = arith.constant 0 : index
    %45 = vector.load %arg6[%c1, %c0_33, %c0_34] : memref<4x128x128xf32, #tpu.memory_space<vmem>>, vector<1x128x128xf32>
    %46 = vector.shape_cast %45 : vector<1x128x128xf32> to vector<128x128xf32>
    %cst_35 = arith.constant dense<0.000000e+00> : vector<8x128xf32>
    %47 = tpu.matmul %12, %46, %cst_35 {dimension_numbers = #tpu.dot_dimension_numbers<[1], [0], [0], [1], [0, 0, 1, 1], [], []>} : vector<8x128xf32>, vector<128x128xf32>, vector<8x128xf32> -> vector<8x128xf32>
    %c1_36 = arith.constant 1 : index
    %c0_37 = arith.constant 0 : index
    %48 = vector.load %arg7[%c1_36, %c0_37] : memref<4x128xf32, #tpu.memory_space<vmem>>, vector<1x128xf32>
    %49 = vector.broadcast %48 : vector<1x128xf32> to vector<8x128xf32>
    %50 = arith.addf %47, %49 : vector<8x128xf32>
    %cst_38 = arith.constant 0.000000e+00 : f32
    %51 = vector.broadcast %cst_38 : f32 to vector<8x128xf32>
    %52 = arith.maximumf %50, %51 : vector<8x128xf32>
    %c1_39 = arith.constant 1 : index
    %c0_40 = arith.constant 0 : index
    %c0_41 = arith.constant 0 : index
    %53 = vector.load %arg8[%c1_39, %c0_40, %c0_41] : memref<4x128x128xf32, #tpu.memory_space<vmem>>, vector<1x128x128xf32>
    %54 = vector.shape_cast %53 : vector<1x128x128xf32> to vector<128x128xf32>
    %cst_42 = arith.constant dense<0.000000e+00> : vector<8x128xf32>
    %55 = tpu.matmul %52, %54, %cst_42 {dimension_numbers = #tpu.dot_dimension_numbers<[1], [0], [0], [1], [0, 0, 1, 1], [], []>} : vector<8x128xf32>, vector<128x128xf32>, vector<8x128xf32> -> vector<8x128xf32>
    %c1_43 = arith.constant 1 : index
    %c0_44 = arith.constant 0 : index
    %56 = vector.load %arg9[%c1_43, %c0_44] : memref<4x128xf32, #tpu.memory_space<vmem>>, vector<1x128xf32>
    %57 = vector.broadcast %56 : vector<1x128xf32> to vector<8x128xf32>
    %58 = arith.addf %55, %57 : vector<8x128xf32>
    %59 = vector.extract_strided_slice %58 {offsets = [0, 0], sizes = [5, 128], strides = [1, 1]} : vector<8x128xf32> to vector<5x128xf32>
    %c0_45 = arith.constant 0 : index
    %c0_46 = arith.constant 0 : index
    %60 = vector.load %arg13[%c0_45, %c0_46] : memref<5x128xf32, #tpu.memory_space<vmem>>, vector<5x128xf32>
    tpu.vector_store %arg13[%c0_45, %c0_46], %59 {strides = array<i32>} : memref<5x128xf32, #tpu.memory_space<vmem>>, vector<5x128xf32>,
    %c2 = arith.constant 2 : index
    %c0_47 = arith.constant 0 : index
    %c0_48 = arith.constant 0 : index
    %61 = vector.load %arg6[%c2, %c0_47, %c0_48] : memref<4x128x128xf32, #tpu.memory_space<vmem>>, vector<1x128x128xf32>
    %62 = vector.shape_cast %61 : vector<1x128x128xf32> to vector<128x128xf32>
    %cst_49 = arith.constant dense<0.000000e+00> : vector<8x128xf32>
    %63 = tpu.matmul %12, %62, %cst_49 {dimension_numbers = #tpu.dot_dimension_numbers<[1], [0], [0], [1], [0, 0, 1, 1], [], []>} : vector<8x128xf32>, vector<128x128xf32>, vector<8x128xf32> -> vector<8x128xf32>
    %c2_50 = arith.constant 2 : index
    %c0_51 = arith.constant 0 : index
    %64 = vector.load %arg7[%c2_50, %c0_51] : memref<4x128xf32, #tpu.memory_space<vmem>>, vector<1x128xf32>
    %65 = vector.broadcast %64 : vector<1x128xf32> to vector<8x128xf32>
    %66 = arith.addf %63, %65 : vector<8x128xf32>
    %cst_52 = arith.constant 0.000000e+00 : f32
    %67 = vector.broadcast %cst_52 : f32 to vector<8x128xf32>
    %68 = arith.maximumf %66, %67 : vector<8x128xf32>
    %c2_53 = arith.constant 2 : index
    %c0_54 = arith.constant 0 : index
    %c0_55 = arith.constant 0 : index
    %69 = vector.load %arg8[%c2_53, %c0_54, %c0_55] : memref<4x128x128xf32, #tpu.memory_space<vmem>>, vector<1x128x128xf32>
    %70 = vector.shape_cast %69 : vector<1x128x128xf32> to vector<128x128xf32>
    %cst_56 = arith.constant dense<0.000000e+00> : vector<8x128xf32>
    %71 = tpu.matmul %68, %70, %cst_56 {dimension_numbers = #tpu.dot_dimension_numbers<[1], [0], [0], [1], [0, 0, 1, 1], [], []>} : vector<8x128xf32>, vector<128x128xf32>, vector<8x128xf32> -> vector<8x128xf32>
    %c2_57 = arith.constant 2 : index
    %c0_58 = arith.constant 0 : index
    %72 = vector.load %arg9[%c2_57, %c0_58] : memref<4x128xf32, #tpu.memory_space<vmem>>, vector<1x128xf32>
    %73 = vector.broadcast %72 : vector<1x128xf32> to vector<8x128xf32>
    %74 = arith.addf %71, %73 : vector<8x128xf32>
    %75 = vector.extract_strided_slice %74 {offsets = [0, 0], sizes = [2, 128], strides = [1, 1]} : vector<8x128xf32> to vector<2x128xf32>
    %c0_59 = arith.constant 0 : index
    %c0_60 = arith.constant 0 : index
    %76 = vector.load %arg14[%c0_59, %c0_60] : memref<5x128xf32, #tpu.memory_space<vmem>>, vector<2x128xf32>
    tpu.vector_store %arg14[%c0_59, %c0_60], %75 {strides = array<i32>} : memref<5x128xf32, #tpu.memory_space<vmem>>, vector<2x128xf32>,
    %77 = vector.extract_strided_slice %74 {offsets = [5, 0], sizes = [3, 128], strides = [1, 1]} : vector<8x128xf32> to vector<3x128xf32>
    %c2_61 = arith.constant 2 : index
    %c0_62 = arith.constant 0 : index
    %78 = vector.load %arg14[%c2_61, %c0_62] : memref<5x128xf32, #tpu.memory_space<vmem>>, vector<3x128xf32>
    tpu.vector_store %arg14[%c2_61, %c0_62], %77 {strides = array<i32>} : memref<5x128xf32, #tpu.memory_space<vmem>>, vector<3x128xf32>,
    %c3 = arith.constant 3 : index
    %c0_63 = arith.constant 0 : index
    %c0_64 = arith.constant 0 : index
    %79 = vector.load %arg6[%c3, %c0_63, %c0_64] : memref<4x128x128xf32, #tpu.memory_space<vmem>>, vector<1x128x128xf32>
    %80 = vector.shape_cast %79 : vector<1x128x128xf32> to vector<128x128xf32>
    %cst_65 = arith.constant dense<0.000000e+00> : vector<8x128xf32>
    %81 = tpu.matmul %12, %80, %cst_65 {dimension_numbers = #tpu.dot_dimension_numbers<[1], [0], [0], [1], [0, 0, 1, 1], [], []>} : vector<8x128xf32>, vector<128x128xf32>, vector<8x128xf32> -> vector<8x128xf32>
    %c3_66 = arith.constant 3 : index
    %c0_67 = arith.constant 0 : index
    %82 = vector.load %arg7[%c3_66, %c0_67] : memref<4x128xf32, #tpu.memory_space<vmem>>, vector<1x128xf32>
    %83 = vector.broadcast %82 : vector<1x128xf32> to vector<8x128xf32>
    %84 = arith.addf %81, %83 : vector<8x128xf32>
    %cst_68 = arith.constant 0.000000e+00 : f32
    %85 = vector.broadcast %cst_68 : f32 to vector<8x128xf32>
    %86 = arith.maximumf %84, %85 : vector<8x128xf32>
    %c3_69 = arith.constant 3 : index
    %c0_70 = arith.constant 0 : index
    %c0_71 = arith.constant 0 : index
    %87 = vector.load %arg8[%c3_69, %c0_70, %c0_71] : memref<4x128x128xf32, #tpu.memory_space<vmem>>, vector<1x128x128xf32>
    %88 = vector.shape_cast %87 : vector<1x128x128xf32> to vector<128x128xf32>
    %cst_72 = arith.constant dense<0.000000e+00> : vector<8x128xf32>
    %89 = tpu.matmul %86, %88, %cst_72 {dimension_numbers = #tpu.dot_dimension_numbers<[1], [0], [0], [1], [0, 0, 1, 1], [], []>} : vector<8x128xf32>, vector<128x128xf32>, vector<8x128xf32> -> vector<8x128xf32>
    %c3_73 = arith.constant 3 : index
    %c0_74 = arith.constant 0 : index
    %90 = vector.load %arg9[%c3_73, %c0_74] : memref<4x128xf32, #tpu.memory_space<vmem>>, vector<1x128xf32>
    %91 = vector.broadcast %90 : vector<1x128xf32> to vector<8x128xf32>
    %92 = arith.addf %89, %91 : vector<8x128xf32>
    %93 = vector.extract_strided_slice %92 {offsets = [2, 0], sizes = [6, 128], strides = [1, 1]} : vector<8x128xf32> to vector<6x128xf32>
    %c0_75 = arith.constant 0 : index
    %c0_76 = arith.constant 0 : index
    %94 = vector.load %arg15[%c0_75, %c0_76] : memref<6x128xf32, #tpu.memory_space<vmem>>, vector<6x128xf32>
    tpu.vector_store %arg15[%c0_75, %c0_76], %93 {strides = array<i32>} : memref<6x128xf32, #tpu.memory_space<vmem>>, vector<6x128xf32>,
    return
  }
  func.func @transform_0(%arg0: i32) -> (i32, i32) {
    %c0_i32 = arith.constant 0 : i32
    %c0_i32_0 = arith.constant 0 : i32
    %c0_i32_1 = arith.constant 0 : i32
    return %c0_i32, %c0_i32_0 : i32, i32
  }
  func.func @transform_1(%arg0: i32) -> (i32, i32) {
    %c0_i32 = arith.constant 0 : i32
    %c0_i32_0 = arith.constant 0 : i32
    %c0_i32_1 = arith.constant 0 : i32
    return %c0_i32, %c0_i32_0 : i32, i32
  }
  func.func @transform_2(%arg0: i32) -> (i32, i32) {
    %c0_i32 = arith.constant 0 : i32
    %c0_i32_0 = arith.constant 0 : i32
    %c0_i32_1 = arith.constant 0 : i32
    return %c0_i32, %c0_i32_0 : i32, i32
  }
  func.func @transform_3(%arg0: i32) -> (i32, i32) {
    %c0_i32 = arith.constant 0 : i32
    %c0_i32_0 = arith.constant 0 : i32
    %c0_i32_1 = arith.constant 0 : i32
    return %c0_i32, %c0_i32_0 : i32, i32
  }
  func.func @transform_4(%arg0: i32) -> (i32, i32) {
    %c0_i32 = arith.constant 0 : i32
    %c0_i32_0 = arith.constant 0 : i32
    %c0_i32_1 = arith.constant 0 : i32
    return %c0_i32, %c0_i32_0 : i32, i32
  }
  func.func @transform_5(%arg0: i32) -> (i32, i32, i32) {
    %c0_i32 = arith.constant 0 : i32
    %c0_i32_0 = arith.constant 0 : i32
    %c0_i32_1 = arith.constant 0 : i32
    %c0_i32_2 = arith.constant 0 : i32
    return %c0_i32, %c0_i32_0, %c0_i32_1 : i32, i32, i32
  }
  func.func @transform_6(%arg0: i32) -> (i32, i32) {
    %c0_i32 = arith.constant 0 : i32
    %c0_i32_0 = arith.constant 0 : i32
    %c0_i32_1 = arith.constant 0 : i32
    return %c0_i32, %c0_i32_0 : i32, i32
  }
  func.func @transform_7(%arg0: i32) -> (i32, i32, i32) {
    %c0_i32 = arith.constant 0 : i32
    %c0_i32_0 = arith.constant 0 : i32
    %c0_i32_1 = arith.constant 0 : i32
    %c0_i32_2 = arith.constant 0 : i32
    return %c0_i32, %c0_i32_0, %c0_i32_1 : i32, i32, i32
  }
  func.func @transform_8(%arg0: i32) -> (i32, i32) {
    %c0_i32 = arith.constant 0 : i32
    %c0_i32_0 = arith.constant 0 : i32
    %c0_i32_1 = arith.constant 0 : i32
    return %c0_i32, %c0_i32_0 : i32, i32
  }
  func.func @transform_9(%arg0: i32) -> (i32, i32) {
    %c0_i32 = arith.constant 0 : i32
    %c0_i32_0 = arith.constant 0 : i32
    %c0_i32_1 = arith.constant 0 : i32
    return %c0_i32, %c0_i32_0 : i32, i32
  }
  func.func @transform_10(%arg0: i32) -> (i32, i32) {
    %c0_i32 = arith.constant 0 : i32
    %c0_i32_0 = arith.constant 0 : i32
    %c0_i32_1 = arith.constant 0 : i32
    return %c0_i32, %c0_i32_0 : i32, i32
  }
  func.func @transform_11(%arg0: i32) -> (i32, i32) {
    %c0_i32 = arith.constant 0 : i32
    %c0_i32_0 = arith.constant 0 : i32
    %c0_i32_1 = arith.constant 0 : i32
    return %c0_i32, %c0_i32_0 : i32, i32
  }
  func.func @transform_12(%arg0: i32) -> (i32, i32) {
    %c0_i32 = arith.constant 0 : i32
    %c0_i32_0 = arith.constant 0 : i32
    %c0_i32_1 = arith.constant 0 : i32
    return %c0_i32, %c0_i32_0 : i32, i32
  }
  func.func @transform_13(%arg0: i32) -> (i32, i32) {
    %c0_i32 = arith.constant 0 : i32
    %c0_i32_0 = arith.constant 0 : i32
    %c0_i32_1 = arith.constant 0 : i32
    return %c0_i32, %c0_i32_0 : i32, i32
  }
  func.func @transform_14(%arg0: i32) -> (i32, i32) {
    %c0_i32 = arith.constant 0 : i32
    %c0_i32_0 = arith.constant 0 : i32
    %c0_i32_1 = arith.constant 0 : i32
    return %c0_i32, %c0_i32_0 : i32, i32
  }
}

</mosaic_0001>

<llo_original>
// kernel: mddnet_forward.1
$region0: #{mddnet_forward.1}
  #allocation0 [shape = 'u32[]', space=smem, size = 0x4, offset = 0x4, fixed_abs, tag = 'smem constant byte address 0x4 - core index']
  #allocation1 [shape = 'u32[72,128]{1,0:T(1,128)}', space=vmem, size = 0x9000, scoped, tag = 'internal scratch']
  %s0 = inlined_call_operand.vmem [shape: f32[8,1024], index: 0, kind: input, shape index: {}]
  %s1 = inlined_call_operand.vmem [shape: f32[1024,32], index: 1, kind: input, shape index: {}]
  %s2 = inlined_call_operand.vmem [shape: f32[1,32], index: 2, kind: input, shape index: {}]
  %s3 = inlined_call_operand.vmem [shape: f32[32,128], index: 3, kind: input, shape index: {}]
  %s4 = inlined_call_operand.vmem [shape: f32[1,128], index: 4, kind: input, shape index: {}]
  %s5 = inlined_call_operand.vmem [shape: f32[4,128,128], index: 5, kind: input, shape index: {}]
  %s6 = inlined_call_operand.vmem [shape: f32[4,128], index: 6, kind: input, shape index: {}]
  %s7 = inlined_call_operand.vmem [shape: f32[4,128,128], index: 7, kind: input, shape index: {}]
  %s8 = inlined_call_operand.vmem [shape: f32[4,128], index: 8, kind: input, shape index: {}]
  %s9 = inlined_call_operand.hbm [shape: f32[8,128], index: 9, kind: output, shape index: {0}]
  %s10 = inlined_call_operand.hbm [shape: f32[8,128], index: 10, kind: output, shape index: {1}]
  %s11 = inlined_call_operand.hbm [shape: f32[8,128], index: 11, kind: output, shape index: {2}]
  %s12 = inlined_call_operand.hbm [shape: f32[5,128], index: 12, kind: output, shape index: {3}]
  %s13 = inlined_call_operand.hbm [shape: f32[5,128], index: 13, kind: output, shape index: {4}]
  %s14 = inlined_call_operand.hbm [shape: f32[6,128], index: 14, kind: output, shape index: {5}]
  %15 = xla_tuple %s9, %s10, %s11, %s12, %s13, %s14
  %s16 = sld [smem:[#allocation0]]
  $region86: #{mddnet_forward.1} parent=0
    _
  %s18 = ssub.s32 1, %s16
  %s19 = scalar_select 0, %s18, %s16
  $region1: #{mddnet_forward.1} parent=0
    #allocation2 [shape = 'u8[4096]{0}', space=vmem, size = 0x1000, scoped, tag = 'output window, operand 0, single buffered']
    #allocation3 [shape = 's32[1]{0}', space=sflag, size = 0x4, scoped, tag = 'scoped memory for mddnet_forward.1']
    #allocation4 [shape = 'u8[4096]{0}', space=vmem, size = 0x1000, scoped, tag = 'output window, operand 1, single buffered']
    #allocation5 [shape = 's32[1]{0}', space=sflag, size = 0x4, scoped, tag = 'scoped memory for mddnet_forward.1']
    #allocation6 [shape = 'u8[4096]{0}', space=vmem, size = 0x1000, scoped, tag = 'output window, operand 2, single buffered']
    #allocation7 [shape = 'u8[4096]{0}', space=vmem, size = 0x1000, scoped, tag = 'output window, operand 3, single buffered']
    #allocation8 [shape = 's32[1]{0}', space=sflag, size = 0x4, scoped, tag = 'scoped memory for mddnet_forward.1']
    #allocation9 [shape = 'u8[4096]{0}', space=vmem, size = 0x1000, scoped, tag = 'output window, operand 4, single buffered']
    #allocation10 [shape = 'u8[4096]{0}', space=vmem, size = 0x1000, scoped, tag = 'output window, operand 5, single buffered']
    #allocation11 [shape = 's32[1]{0}', space=sflag, size = 0x4, scoped, tag = 'scoped memory for mddnet_forward.1']
    %20 = vsyncpa [#allocation3], 0
    %21 = vsyncpa [#allocation5], 0
    %22 = vsyncpa [#allocation8], 0
    %23 = vsyncpa [#allocation11], 0
    // Predicated region
    $region2: #{mddnet_forward.1} parent=1 // pred_check
      _
    $region3: #{mddnet_forward.1} parent=1 // pred_check_branch
      %25 = sbr.rel (0) target = $region5
    $region4: #{mddnet_forward.1} parent=1 // pred_region
      _
    $region5: #{mddnet_forward.1} parent=1 // pred_fallthru
      _
    // Predicated region
    $region6: #{mddnet_forward.1} parent=1 // pred_check
      _
    $region7: #{mddnet_forward.1} parent=1 // pred_check_branch
      %27 = sbr.rel (0) target = $region9
    $region8: #{mddnet_forward.1} parent=1 // pred_region
      _
    $region9: #{mddnet_forward.1} parent=1 // pred_fallthru
      _
    // Predicated region
    $region10: #{mddnet_forward.1} parent=1 // pred_check
      _
    $region11: #{mddnet_forward.1} parent=1 // pred_check_branch
      %29 = sbr.rel (0) target = $region13
    $region12: #{mddnet_forward.1} parent=1 // pred_region
      _
    $region13: #{mddnet_forward.1} parent=1 // pred_fallthru
      _
    // Predicated region
    $region14: #{mddnet_forward.1} parent=1 // pred_check
      _
    $region15: #{mddnet_forward.1} parent=1 // pred_check_branch
      %31 = sbr.rel (0) target = $region17
    $region16: #{mddnet_forward.1} parent=1 // pred_region
      _
    $region17: #{mddnet_forward.1} parent=1 // pred_fallthru
      _
    // Predicated region
    $region18: #{mddnet_forward.1} parent=1 // pred_check
      _
    $region19: #{mddnet_forward.1} parent=1 // pred_check_branch
      %33 = sbr.rel (0) target = $region21
    $region20: #{mddnet_forward.1} parent=1 // pred_region
      _
    $region21: #{mddnet_forward.1} parent=1 // pred_fallthru
      _
    // Predicated region
    $region22: #{mddnet_forward.1} parent=1 // pred_check
      _
    $region23: #{mddnet_forward.1} parent=1 // pred_check_branch
      %35 = sbr.rel (0) target = $region25
    $region24: #{mddnet_forward.1} parent=1 // pred_region
      _
    $region25: #{mddnet_forward.1} parent=1 // pred_fallthru
      _
    // Predicated region
    $region26: #{mddnet_forward.1} parent=1 // pred_check
      _
    $region27: #{mddnet_forward.1} parent=1 // pred_check_branch
      %37 = sbr.rel (0) target = $region29
    $region28: #{mddnet_forward.1} parent=1 // pred_region
      _
    $region29: #{mddnet_forward.1} parent=1 // pred_fallthru
      _
    // Predicated region
    $region30: #{mddnet_forward.1} parent=1 // pred_check
      _
    $region31: #{mddnet_forward.1} parent=1 // pred_check_branch
      %39 = sbr.rel (0) target = $region33
    $region32: #{mddnet_forward.1} parent=1 // pred_region
      _
    $region33: #{mddnet_forward.1} parent=1 // pred_fallthru
      _
    // Predicated region
    $region34: #{mddnet_forward.1} parent=1 // pred_check
      _
    $region35: #{mddnet_forward.1} parent=1 // pred_check_branch
      %41 = sbr.rel (0) target = $region37
    $region36: #{mddnet_forward.1} parent=1 // pred_region
      _
    $region37: #{mddnet_forward.1} parent=1 // pred_fallthru
      _
    %v42 = vld [vmem:[%s0] sm:$0xff]
    %v43 = vld [vmem:[%s0 + $0x8] sm:$0xff]
    %v44 = vld [vmem:[%s0 + $0x10] sm:$0xff]
    %v45 = vld [vmem:[%s0 + $0x18] sm:$0xff]
    %v46 = vld [vmem:[%s0 + $0x20] sm:$0xff]
    %v47 = vld [vmem:[%s0 + $0x28] sm:$0xff]
    %v48 = vld [vmem:[%s0 + $0x30] sm:$0xff]
    %v49 = vld [vmem:[%s0 + $0x38] sm:$0xff]
    %v50 = vld [vmem:[%s1] sm:$0xff]
    %v51 = vld [vmem:[%s1 + $0x8] sm:$0xff]
    %v52 = vld [vmem:[%s1 + $0x10] sm:$0xff]
    %v53 = vld [vmem:[%s1 + $0x18] sm:$0xff]
    %v54 = vld [vmem:[%s1 + $0x20] sm:$0xff]
    %v55 = vld [vmem:[%s1 + $0x28] sm:$0xff]
    %v56 = vld [vmem:[%s1 + $0x30] sm:$0xff]
    %v57 = vld [vmem:[%s1 + $0x38] sm:$0xff]
    %v58 = vld [vmem:[%s1 + $0x40] sm:$0xff]
    %v59 = vld [vmem:[%s1 + $0x48] sm:$0xff]
    %v60 = vld [vmem:[%s1 + $0x50] sm:$0xff]
    %v61 = vld [vmem:[%s1 + $0x58] sm:$0xff]
    %v62 = vld [vmem:[%s1 + $0x60] sm:$0xff]
    %v63 = vld [vmem:[%s1 + $0x68] sm:$0xff]
    %v64 = vld [vmem:[%s1 + $0x70] sm:$0xff]
    %v65 = vld [vmem:[%s1 + $0x78] sm:$0xff]
    %v66 = vld [vmem:[%s1 + $0x80] sm:$0xff]
    %v67 = vld [vmem:[%s1 + $0x88] sm:$0xff]
    %v68 = vld [vmem:[%s1 + $0x90] sm:$0xff]
    %v69 = vld [vmem:[%s1 + $0x98] sm:$0xff]
    %v70 = vld [vmem:[%s1 + $0xa0] sm:$0xff]
    %v71 = vld [vmem:[%s1 + $0xa8] sm:$0xff]
    %v72 = vld [vmem:[%s1 + $0xb0] sm:$0xff]
    %v73 = vld [vmem:[%s1 + $0xb8] sm:$0xff]
    %v74 = vld [vmem:[%s1 + $0xc0] sm:$0xff]
    %v75 = vld [vmem:[%s1 + $0xc8] sm:$0xff]
    %v76 = vld [vmem:[%s1 + $0xd0] sm:$0xff]
    %v77 = vld [vmem:[%s1 + $0xd8] sm:$0xff]
    %v78 = vld [vmem:[%s1 + $0xe0] sm:$0xff]
    %v79 = vld [vmem:[%s1 + $0xe8] sm:$0xff]
    %v80 = vld [vmem:[%s1 + $0xf0] sm:$0xff]
    %v81 = vld [vmem:[%s1 + $0xf8] sm:$0xff]
    %v82 = vld [vmem:[%s1 + $0x100] sm:$0xff]
    %v83 = vld [vmem:[%s1 + $0x108] sm:$0xff]
    %v84 = vld [vmem:[%s1 + $0x110] sm:$0xff]
    %v85 = vld [vmem:[%s1 + $0x118] sm:$0xff]
    %v86 = vld [vmem:[%s1 + $0x120] sm:$0xff]
    %v87 = vld [vmem:[%s1 + $0x128] sm:$0xff]
    %v88 = vld [vmem:[%s1 + $0x130] sm:$0xff]
    %v89 = vld [vmem:[%s1 + $0x138] sm:$0xff]
    %v90 = vld [vmem:[%s1 + $0x140] sm:$0xff]
    %v91 = vld [vmem:[%s1 + $0x148] sm:$0xff]
    %v92 = vld [vmem:[%s1 + $0x150] sm:$0xff]
    %v93 = vld [vmem:[%s1 + $0x158] sm:$0xff]
    %v94 = vld [vmem:[%s1 + $0x160] sm:$0xff]
    %v95 = vld [vmem:[%s1 + $0x168] sm:$0xff]
    %v96 = vld [vmem:[%s1 + $0x170] sm:$0xff]
    %v97 = vld [vmem:[%s1 + $0x178] sm:$0xff]
    %v98 = vld [vmem:[%s1 + $0x180] sm:$0xff]
    %v99 = vld [vmem:[%s1 + $0x188] sm:$0xff]
    %v100 = vld [vmem:[%s1 + $0x190] sm:$0xff]
    %v101 = vld [vmem:[%s1 + $0x198] sm:$0xff]
    %v102 = vld [vmem:[%s1 + $0x1a0] sm:$0xff]
    %v103 = vld [vmem:[%s1 + $0x1a8] sm:$0xff]
    %v104 = vld [vmem:[%s1 + $0x1b0] sm:$0xff]
    %v105 = vld [vmem:[%s1 + $0x1b8] sm:$0xff]
    %v106 = vld [vmem:[%s1 + $0x1c0] sm:$0xff]
    %v107 = vld [vmem:[%s1 + $0x1c8] sm:$0xff]
    %v108 = vld [vmem:[%s1 + $0x1d0] sm:$0xff]
    %v109 = vld [vmem:[%s1 + $0x1d8] sm:$0xff]
    %v110 = vld [vmem:[%s1 + $0x1e0] sm:$0xff]
    %v111 = vld [vmem:[%s1 + $0x1e8] sm:$0xff]
    %v112 = vld [vmem:[%s1 + $0x1f0] sm:$0xff]
    %v113 = vld [vmem:[%s1 + $0x1f8] sm:$0xff]
    %v114 = vld [vmem:[%s1 + $0x200] sm:$0xff]
    %v115 = vld [vmem:[%s1 + $0x208] sm:$0xff]
    %v116 = vld [vmem:[%s1 + $0x210] sm:$0xff]
    %v117 = vld [vmem:[%s1 + $0x218] sm:$0xff]
    %v118 = vld [vmem:[%s1 + $0x220] sm:$0xff]
    %v119 = vld [vmem:[%s1 + $0x228] sm:$0xff]
    %v120 = vld [vmem:[%s1 + $0x230] sm:$0xff]
    %v121 = vld [vmem:[%s1 + $0x238] sm:$0xff]
    %v122 = vld [vmem:[%s1 + $0x240] sm:$0xff]
    %v123 = vld [vmem:[%s1 + $0x248] sm:$0xff]
    %v124 = vld [vmem:[%s1 + $0x250] sm:$0xff]
    %v125 = vld [vmem:[%s1 + $0x258] sm:$0xff]
    %v126 = vld [vmem:[%s1 + $0x260] sm:$0xff]
    %v127 = vld [vmem:[%s1 + $0x268] sm:$0xff]
    %v128 = vld [vmem:[%s1 + $0x270] sm:$0xff]
    %v129 = vld [vmem:[%s1 + $0x278] sm:$0xff]
    %v130 = vld [vmem:[%s1 + $0x280] sm:$0xff]
    %v131 = vld [vmem:[%s1 + $0x288] sm:$0xff]
    %v132 = vld [vmem:[%s1 + $0x290] sm:$0xff]
    %v133 = vld [vmem:[%s1 + $0x298] sm:$0xff]
    %v134 = vld [vmem:[%s1 + $0x2a0] sm:$0xff]
    %v135 = vld [vmem:[%s1 + $0x2a8] sm:$0xff]
    %v136 = vld [vmem:[%s1 + $0x2b0] sm:$0xff]
    %v137 = vld [vmem:[%s1 + $0x2b8] sm:$0xff]
    %v138 = vld [vmem:[%s1 + $0x2c0] sm:$0xff]
    %v139 = vld [vmem:[%s1 + $0x2c8] sm:$0xff]
    %v140 = vld [vmem:[%s1 + $0x2d0] sm:$0xff]
    %v141 = vld [vmem:[%s1 + $0x2d8] sm:$0xff]
    %v142 = vld [vmem:[%s1 + $0x2e0] sm:$0xff]
    %v143 = vld [vmem:[%s1 + $0x2e8] sm:$0xff]
    %v144 = vld [vmem:[%s1 + $0x2f0] sm:$0xff]
    %v145 = vld [vmem:[%s1 + $0x2f8] sm:$0xff]
    %v146 = vld [vmem:[%s1 + $0x300] sm:$0xff]
    %v147 = vld [vmem:[%s1 + $0x308] sm:$0xff]
    %v148 = vld [vmem:[%s1 + $0x310] sm:$0xff]
    %v149 = vld [vmem:[%s1 + $0x318] sm:$0xff]
    %v150 = vld [vmem:[%s1 + $0x320] sm:$0xff]
    %v151 = vld [vmem:[%s1 + $0x328] sm:$0xff]
    %v152 = vld [vmem:[%s1 + $0x330] sm:$0xff]
    %v153 = vld [vmem:[%s1 + $0x338] sm:$0xff]
    %v154 = vld [vmem:[%s1 + $0x340] sm:$0xff]
    %v155 = vld [vmem:[%s1 + $0x348] sm:$0xff]
    %v156 = vld [vmem:[%s1 + $0x350] sm:$0xff]
    %v157 = vld [vmem:[%s1 + $0x358] sm:$0xff]
    %v158 = vld [vmem:[%s1 + $0x360] sm:$0xff]
    %v159 = vld [vmem:[%s1 + $0x368] sm:$0xff]
    %v160 = vld [vmem:[%s1 + $0x370] sm:$0xff]
    %v161 = vld [vmem:[%s1 + $0x378] sm:$0xff]
    %v162 = vld [vmem:[%s1 + $0x380] sm:$0xff]
    %v163 = vld [vmem:[%s1 + $0x388] sm:$0xff]
    %v164 = vld [vmem:[%s1 + $0x390] sm:$0xff]
    %v165 = vld [vmem:[%s1 + $0x398] sm:$0xff]
    %v166 = vld [vmem:[%s1 + $0x3a0] sm:$0xff]
    %v167 = vld [vmem:[%s1 + $0x3a8] sm:$0xff]
    %v168 = vld [vmem:[%s1 + $0x3b0] sm:$0xff]
    %v169 = vld [vmem:[%s1 + $0x3b8] sm:$0xff]
    %v170 = vld [vmem:[%s1 + $0x3c0] sm:$0xff]
    %v171 = vld [vmem:[%s1 + $0x3c8] sm:$0xff]
    %v172 = vld [vmem:[%s1 + $0x3d0] sm:$0xff]
    %v173 = vld [vmem:[%s1 + $0x3d8] sm:$0xff]
    %v174 = vld [vmem:[%s1 + $0x3e0] sm:$0xff]
    %v175 = vld [vmem:[%s1 + $0x3e8] sm:$0xff]
    %v176 = vld [vmem:[%s1 + $0x3f0] sm:$0xff]
    %v177 = vld [vmem:[%s1 + $0x3f8] sm:$0xff]
    %v178 = vld [vmem:[%s2] sm:$0x1]
    %v180 = vperm.slane %v178, 0
    %182 = vmatpush.msra.mxu0 %v65
    %183 = vmatpush.msra.mxu0 %v64
    %184 = vmatpush.msra.mxu0 %v63
    %185 = vmatpush.msra.mxu0 %v62
    %186 = vmatpush.msra.mxu0 %v61
    %187 = vmatpush.msra.mxu0 %v60
    %188 = vmatpush.msra.mxu0 %v59
    %189 = vmatpush.msra.mxu0 %v58
    %190 = vmatpush.msra.mxu0 %v57
    %191 = vmatpush.msra.mxu0 %v56
    %192 = vmatpush.msra.mxu0 %v55
    %193 = vmatpush.msra.mxu0 %v54
    %194 = vmatpush.msra.mxu0 %v53
    %195 = vmatpush.msra.mxu0 %v52
    %196 = vmatpush.msra.mxu0 %v51
    %197 = vmatpush.msra.mxu0 %v50
    %198 = vmatmul.f32.gmra.mxu0 %v42
    %v199 = vpop.f32.mrf.mxu0
    %v200 = vadd.f32 %v180, %v199
    %201 = vdwg.mxu0
    %202 = vmatpush.msra.mxu0 %v81
    %203 = vmatpush.msra.mxu0 %v80
    %204 = vmatpush.msra.mxu0 %v79
    %205 = vmatpush.msra.mxu0 %v78
    %206 = vmatpush.msra.mxu0 %v77
    %207 = vmatpush.msra.mxu0 %v76
    %208 = vmatpush.msra.mxu0 %v75
    %209 = vmatpush.msra.mxu0 %v74
    %210 = vmatpush.msra.mxu0 %v73
    %211 = vmatpush.msra.mxu0 %v72
    %212 = vmatpush.msra.mxu0 %v71
    %213 = vmatpush.msra.mxu0 %v70
    %214 = vmatpush.msra.mxu0 %v69
    %215 = vmatpush.msra.mxu0 %v68
    %216 = vmatpush.msra.mxu0 %v67
    %217 = vmatpush.msra.mxu0 %v66
    %218 = vmatmul.f32.gmra.mxu0 %v43
    %v219 = vpop.f32.mrf.mxu0
    %v220 = vadd.f32 %v200, %v219
    %221 = vdwg.mxu0
    %222 = vmatpush.msra.mxu0 %v97
    %223 = vmatpush.msra.mxu0 %v96
    %224 = vmatpush.msra.mxu0 %v95
    %225 = vmatpush.msra.mxu0 %v94
    %226 = vmatpush.msra.mxu0 %v93
    %227 = vmatpush.msra.mxu0 %v92
    %228 = vmatpush.msra.mxu0 %v91
    %229 = vmatpush.msra.mxu0 %v90
    %230 = vmatpush.msra.mxu0 %v89
    %231 = vmatpush.msra.mxu0 %v88
    %232 = vmatpush.msra.mxu0 %v87
    %233 = vmatpush.msra.mxu0 %v86
    %234 = vmatpush.msra.mxu0 %v85
    %235 = vmatpush.msra.mxu0 %v84
    %236 = vmatpush.msra.mxu0 %v83
    %237 = vmatpush.msra.mxu0 %v82
    %238 = vmatmul.f32.gmra.mxu0 %v44
    %v239 = vpop.f32.mrf.mxu0
    %v240 = vadd.f32 %v220, %v239
    %241 = vdwg.mxu0
    %242 = vmatpush.msra.mxu0 %v113
    %243 = vmatpush.msra.mxu0 %v112
    %244 = vmatpush.msra.mxu0 %v111
    %245 = vmatpush.msra.mxu0 %v110
    %246 = vmatpush.msra.mxu0 %v109
    %247 = vmatpush.msra.mxu0 %v108
    %248 = vmatpush.msra.mxu0 %v107
    %249 = vmatpush.msra.mxu0 %v106
    %250 = vmatpush.msra.mxu0 %v105
    %251 = vmatpush.msra.mxu0 %v104
    %252 = vmatpush.msra.mxu0 %v103
    %253 = vmatpush.msra.mxu0 %v102
    %254 = vmatpush.msra.mxu0 %v101
    %255 = vmatpush.msra.mxu0 %v100
    %256 = vmatpush.msra.mxu0 %v99
    %257 = vmatpush.msra.mxu0 %v98
    %258 = vmatmul.f32.gmra.mxu0 %v45
    %v259 = vpop.f32.mrf.mxu0
    %v260 = vadd.f32 %v240, %v259
    %261 = vdwg.mxu0
    %262 = vmatpush.msra.mxu0 %v129
    %263 = vmatpush.msra.mxu0 %v128
    %264 = vmatpush.msra.mxu0 %v127
    %265 = vmatpush.msra.mxu0 %v126
    %266 = vmatpush.msra.mxu0 %v125
    %267 = vmatpush.msra.mxu0 %v124
    %268 = vmatpush.msra.mxu0 %v123
    %269 = vmatpush.msra.mxu0 %v122
    %270 = vmatpush.msra.mxu0 %v121
    %271 = vmatpush.msra.mxu0 %v120
    %272 = vmatpush.msra.mxu0 %v119
    %273 = vmatpush.msra.mxu0 %v118
    %274 = vmatpush.msra.mxu0 %v117
    %275 = vmatpush.msra.mxu0 %v116
    %276 = vmatpush.msra.mxu0 %v115
    %277 = vmatpush.msra.mxu0 %v114
    %278 = vmatmul.f32.gmra.mxu0 %v46
    %v279 = vpop.f32.mrf.mxu0
    %v280 = vadd.f32 %v260, %v279
    %281 = vdwg.mxu0
    %282 = vmatpush.msra.mxu0 %v145
    %283 = vmatpush.msra.mxu0 %v144
    %284 = vmatpush.msra.mxu0 %v143
    %285 = vmatpush.msra.mxu0 %v142
    %286 = vmatpush.msra.mxu0 %v141
    %287 = vmatpush.msra.mxu0 %v140
    %288 = vmatpush.msra.mxu0 %v139
    %289 = vmatpush.msra.mxu0 %v138
    %290 = vmatpush.msra.mxu0 %v137
    %291 = vmatpush.msra.mxu0 %v136
    %292 = vmatpush.msra.mxu0 %v135
    %293 = vmatpush.msra.mxu0 %v134
    %294 = vmatpush.msra.mxu0 %v133
    %295 = vmatpush.msra.mxu0 %v132
    %296 = vmatpush.msra.mxu0 %v131
    %297 = vmatpush.msra.mxu0 %v130
    %298 = vmatmul.f32.gmra.mxu0 %v47
    %v299 = vpop.f32.mrf.mxu0
    %v300 = vadd.f32 %v280, %v299
    %301 = vdwg.mxu0
    %302 = vmatpush.msra.mxu0 %v161
    %303 = vmatpush.msra.mxu0 %v160
    %304 = vmatpush.msra.mxu0 %v159
    %305 = vmatpush.msra.mxu0 %v158
    %306 = vmatpush.msra.mxu0 %v157
    %307 = vmatpush.msra.mxu0 %v156
    %308 = vmatpush.msra.mxu0 %v155
    %309 = vmatpush.msra.mxu0 %v154
    %310 = vmatpush.msra.mxu0 %v153
    %311 = vmatpush.msra.mxu0 %v152
    %312 = vmatpush.msra.mxu0 %v151
    %313 = vmatpush.msra.mxu0 %v150
    %314 = vmatpush.msra.mxu0 %v149
    %315 = vmatpush.msra.mxu0 %v148
    %316 = vmatpush.msra.mxu0 %v147
    %317 = vmatpush.msra.mxu0 %v146
    %318 = vmatmul.f32.gmra.mxu0 %v48
    %v319 = vpop.f32.mrf.mxu0
    %v320 = vadd.f32 %v300, %v319
    %321 = vdwg.mxu0
    %322 = vmatpush.msra.mxu0 %v177
    %323 = vmatpush.msra.mxu0 %v176
    %324 = vmatpush.msra.mxu0 %v175
    %325 = vmatpush.msra.mxu0 %v174
    %326 = vmatpush.msra.mxu0 %v173
    %327 = vmatpush.msra.mxu0 %v172
    %328 = vmatpush.msra.mxu0 %v171
    %329 = vmatpush.msra.mxu0 %v170
    %330 = vmatpush.msra.mxu0 %v169
    %331 = vmatpush.msra.mxu0 %v168
    %332 = vmatpush.msra.mxu0 %v167
    %333 = vmatpush.msra.mxu0 %v166
    %334 = vmatpush.msra.mxu0 %v165
    %335 = vmatpush.msra.mxu0 %v164
    %336 = vmatpush.msra.mxu0 %v163
    %337 = vmatpush.msra.mxu0 %v162
    %338 = vmatmul.f32.gmra.mxu0 %v49
    %v339 = vpop.f32.mrf.mxu0
    %v340 = vadd.f32 %v320, %v339
    %341 = vdwg.mxu0
    %v342 = vld [vmem:[%s3] sm:$0xff]
    %v343 = vld [vmem:[%s3 + $0x8] sm:$0xff]
    %v344 = vld [vmem:[%s3 + $0x10] sm:$0xff]
    %v345 = vld [vmem:[%s3 + $0x18] sm:$0xff]
    %v346 = vld [vmem:[%s4] sm:$0x1]
    %v348 = vperm.slane %v346, 0
    %vm350 = vcmask 261120
    %v352 = vsel %vm350, %v340, 0
    %354 = vmatpush.msra.mxu0 0.0
    %355 = vmatpush.msra.mxu0 0.0
    %356 = vmatpush.msra.mxu0 0.0
    %357 = vmatpush.msra.mxu0 0.0
    %358 = vmatpush.msra.mxu0 0.0
    %359 = vmatpush.msra.mxu0 0.0
    %360 = vmatpush.msra.mxu0 0.0
    %361 = vmatpush.msra.mxu0 0.0
    %362 = vmatpush.msra.mxu0 0.0
    %363 = vmatpush.msra.mxu0 0.0
    %364 = vmatpush.msra.mxu0 0.0
    %365 = vmatpush.msra.mxu0 0.0
    %366 = vmatpush.msra.mxu0 %v345
    %367 = vmatpush.msra.mxu0 %v344
    %368 = vmatpush.msra.mxu0 %v343
    %369 = vmatpush.msra.mxu0 %v342
    %370 = vmatmul.f32.gmra.mxu0 %v352
    %v371 = vpop.f32.mrf.mxu0
    %v372 = vadd.f32 %v348, %v371
    %373 = vdwg.mxu0
    %v374 = vmax.f32 %v372, 0.0
    %375 = vst [vmem:[#allocation2] sm:$0xff] %v374
    %v376 = vld [vmem:[%s5] sm:$0xff]
    %v377 = vld [vmem:[%s5 + $0x8] sm:$0xff]
    %v378 = vld [vmem:[%s5 + $0x10] sm:$0xff]
    %v379 = vld [vmem:[%s5 + $0x18] sm:$0xff]
    %v380 = vld [vmem:[%s5 + $0x20] sm:$0xff]
    %v381 = vld [vmem:[%s5 + $0x28] sm:$0xff]
    %v382 = vld [vmem:[%s5 + $0x30] sm:$0xff]
    %v383 = vld [vmem:[%s5 + $0x38] sm:$0xff]
    %v384 = vld [vmem:[%s5 + $0x40] sm:$0xff]
    %v385 = vld [vmem:[%s5 + $0x48] sm:$0xff]
    %v386 = vld [vmem:[%s5 + $0x50] sm:$0xff]
    %v387 = vld [vmem:[%s5 + $0x58] sm:$0xff]
    %v388 = vld [vmem:[%s5 + $0x60] sm:$0xff]
    %v389 = vld [vmem:[%s5 + $0x68] sm:$0xff]
    %v390 = vld [vmem:[%s5 + $0x70] sm:$0xff]
    %v391 = vld [vmem:[%s5 + $0x78] sm:$0xff]
    %v392 = vld [vmem:[%s6] sm:$0x1]
    %v393 = vperm.slane %v392, 0
    %394 = vmatpush.msra.mxu0 %v391
    %395 = vmatpush.msra.mxu0 %v390
    %396 = vmatpush.msra.mxu0 %v389
    %397 = vmatpush.msra.mxu0 %v388
    %398 = vmatpush.msra.mxu0 %v387
    %399 = vmatpush.msra.mxu0 %v386
    %400 = vmatpush.msra.mxu0 %v385
    %401 = vmatpush.msra.mxu0 %v384
    %402 = vmatpush.msra.mxu0 %v383
    %403 = vmatpush.msra.mxu0 %v382
    %404 = vmatpush.msra.mxu0 %v381
    %405 = vmatpush.msra.mxu0 %v380
    %406 = vmatpush.msra.mxu0 %v379
    %407 = vmatpush.msra.mxu0 %v378
    %408 = vmatpush.msra.mxu0 %v377
    %409 = vmatpush.msra.mxu0 %v376
    %410 = vmatmul.f32.gmra.mxu0 %v374
    %v411 = vpop.f32.mrf.mxu0
    %v412 = vadd.f32 %v393, %v411
    %413 = vdwg.mxu0
    %v414 = vmax.f32 %v412, 0.0
    %v415 = vld [vmem:[%s7] sm:$0xff]
    %v416 = vld [vmem:[%s7 + $0x8] sm:$0xff]
    %v417 = vld [vmem:[%s7 + $0x10] sm:$0xff]
    %v418 = vld [vmem:[%s7 + $0x18] sm:$0xff]
    %v419 = vld [vmem:[%s7 + $0x20] sm:$0xff]
    %v420 = vld [vmem:[%s7 + $0x28] sm:$0xff]
    %v421 = vld [vmem:[%s7 + $0x30] sm:$0xff]
    %v422 = vld [vmem:[%s7 + $0x38] sm:$0xff]
    %v423 = vld [vmem:[%s7 + $0x40] sm:$0xff]
    %v424 = vld [vmem:[%s7 + $0x48] sm:$0xff]
    %v425 = vld [vmem:[%s7 + $0x50] sm:$0xff]
    %v426 = vld [vmem:[%s7 + $0x58] sm:$0xff]
    %v427 = vld [vmem:[%s7 + $0x60] sm:$0xff]
    %v428 = vld [vmem:[%s7 + $0x68] sm:$0xff]
    %v429 = vld [vmem:[%s7 + $0x70] sm:$0xff]
    %v430 = vld [vmem:[%s7 + $0x78] sm:$0xff]
    %v431 = vld [vmem:[%s8] sm:$0x1]
    %v432 = vperm.slane %v431, 0
    %433 = vmatpush.msra.mxu0 %v430
    %434 = vmatpush.msra.mxu0 %v429
    %435 = vmatpush.msra.mxu0 %v428
    %436 = vmatpush.msra.mxu0 %v427
    %437 = vmatpush.msra.mxu0 %v426
    %438 = vmatpush.msra.mxu0 %v425
    %439 = vmatpush.msra.mxu0 %v424
    %440 = vmatpush.msra.mxu0 %v423
    %441 = vmatpush.msra.mxu0 %v422
    %442 = vmatpush.msra.mxu0 %v421
    %443 = vmatpush.msra.mxu0 %v420
    %444 = vmatpush.msra.mxu0 %v419
    %445 = vmatpush.msra.mxu0 %v418
    %446 = vmatpush.msra.mxu0 %v417
    %447 = vmatpush.msra.mxu0 %v416
    %448 = vmatpush.msra.mxu0 %v415
    %449 = vmatmul.f32.gmra.mxu0 %v414
    %v450 = vpop.f32.mrf.mxu0
    %v451 = vadd.f32 %v432, %v450
    %452 = vdwg.mxu0
    %453 = vst [vmem:[#allocation4] sm:$0xff] %v451
    %v454 = vlaneseq
    %v455 = vand.u32 %v454, 127
    %vm456 = vcmp.lt.s32.totalorder %v455, 31
    %v457 = vsel %vm456, %v451, -inf
    %458 = vmax.xlane.f32.xlu0 %v457
    %v459 = vpop.xlane.xlu0 %458
    %v460 = vsub.f32 %v457, %v459
    %v461 = vmul.f32 %v460, 1.442695
    %v462 = vpow.pop %v461
    %463 = vadd.xlane.f32.xlu0 %v462
    %v464 = vpop.xlane.xlu0 %463
    %v465 = vrcp.pop %v464
    %v466 = vmul.f32 %v462, %v465
    %467 = vst [vmem:[#allocation6] sm:$0xff] %v466
    %s468 = scalar_lea.vmem %s5, 128
    %v469 = vld [vmem:[%s468] sm:$0xff]
    %v470 = vld [vmem:[%s468 + $0x8] sm:$0xff]
    %v471 = vld [vmem:[%s468 + $0x10] sm:$0xff]
    %v472 = vld [vmem:[%s468 + $0x18] sm:$0xff]
    %v473 = vld [vmem:[%s468 + $0x20] sm:$0xff]
    %v474 = vld [vmem:[%s468 + $0x28] sm:$0xff]
    %v475 = vld [vmem:[%s468 + $0x30] sm:$0xff]
    %v476 = vld [vmem:[%s468 + $0x38] sm:$0xff]
    %v477 = vld [vmem:[%s468 + $0x40] sm:$0xff]
    %v478 = vld [vmem:[%s468 + $0x48] sm:$0xff]
    %v479 = vld [vmem:[%s468 + $0x50] sm:$0xff]
    %v480 = vld [vmem:[%s468 + $0x58] sm:$0xff]
    %v481 = vld [vmem:[%s468 + $0x60] sm:$0xff]
    %v482 = vld [vmem:[%s468 + $0x68] sm:$0xff]
    %v483 = vld [vmem:[%s468 + $0x70] sm:$0xff]
    %v484 = vld [vmem:[%s468 + $0x78] sm:$0xff]
    %v485 = vld [vmem:[%s6 + $0x1] sm:$0x1]
    %v486 = vperm.slane %v485, 0
    %487 = vmatpush.msra.mxu0 %v484
    %488 = vmatpush.msra.mxu0 %v483
    %489 = vmatpush.msra.mxu0 %v482
    %490 = vmatpush.msra.mxu0 %v481
    %491 = vmatpush.msra.mxu0 %v480
    %492 = vmatpush.msra.mxu0 %v479
    %493 = vmatpush.msra.mxu0 %v478
    %494 = vmatpush.msra.mxu0 %v477
    %495 = vmatpush.msra.mxu0 %v476
    %496 = vmatpush.msra.mxu0 %v475
    %497 = vmatpush.msra.mxu0 %v474
    %498 = vmatpush.msra.mxu0 %v473
    %499 = vmatpush.msra.mxu0 %v472
    %500 = vmatpush.msra.mxu0 %v471
    %501 = vmatpush.msra.mxu0 %v470
    %502 = vmatpush.msra.mxu0 %v469
    %503 = vmatmul.f32.gmra.mxu0 %v374
    %v504 = vpop.f32.mrf.mxu0
    %v505 = vadd.f32 %v486, %v504
    %506 = vdwg.mxu0
    %v507 = vmax.f32 %v505, 0.0
    %s508 = scalar_lea.vmem %s7, 128
    %v509 = vld [vmem:[%s508] sm:$0xff]
    %v510 = vld [vmem:[%s508 + $0x8] sm:$0xff]
    %v511 = vld [vmem:[%s508 + $0x10] sm:$0xff]
    %v512 = vld [vmem:[%s508 + $0x18] sm:$0xff]
    %v513 = vld [vmem:[%s508 + $0x20] sm:$0xff]
    %v514 = vld [vmem:[%s508 + $0x28] sm:$0xff]
    %v515 = vld [vmem:[%s508 + $0x30] sm:$0xff]
    %v516 = vld [vmem:[%s508 + $0x38] sm:$0xff]
    %v517 = vld [vmem:[%s508 + $0x40] sm:$0xff]
    %v518 = vld [vmem:[%s508 + $0x48] sm:$0xff]
    %v519 = vld [vmem:[%s508 + $0x50] sm:$0xff]
    %v520 = vld [vmem:[%s508 + $0x58] sm:$0xff]
    %v521 = vld [vmem:[%s508 + $0x60] sm:$0xff]
    %v522 = vld [vmem:[%s508 + $0x68] sm:$0xff]
    %v523 = vld [vmem:[%s508 + $0x70] sm:$0xff]
    %v524 = vld [vmem:[%s508 + $0x78] sm:$0xff]
    %v525 = vld [vmem:[%s8 + $0x1] sm:$0x1]
    %v526 = vperm.slane %v525, 0
    %527 = vmatpush.msra.mxu0 %v524
    %528 = vmatpush.msra.mxu0 %v523
    %529 = vmatpush.msra.mxu0 %v522
    %530 = vmatpush.msra.mxu0 %v521
    %531 = vmatpush.msra.mxu0 %v520
    %532 = vmatpush.msra.mxu0 %v519
    %533 = vmatpush.msra.mxu0 %v518
    %534 = vmatpush.msra.mxu0 %v517
    %535 = vmatpush.msra.mxu0 %v516
    %536 = vmatpush.msra.mxu0 %v515
    %537 = vmatpush.msra.mxu0 %v514
    %538 = vmatpush.msra.mxu0 %v513
    %539 = vmatpush.msra.mxu0 %v512
    %540 = vmatpush.msra.mxu0 %v511
    %541 = vmatpush.msra.mxu0 %v510
    %542 = vmatpush.msra.mxu0 %v509
    %543 = vmatmul.f32.gmra.mxu0 %v507
    %v544 = vpop.f32.mrf.mxu0
    %v545 = vadd.f32 %v526, %v544
    %546 = vdwg.mxu0
    %547 = vst [vmem:[#allocation7] sm:$0x1f] %v545
    %s548 = scalar_lea.vmem %s5, 256
    %v549 = vld [vmem:[%s548] sm:$0xff]
    %v550 = vld [vmem:[%s548 + $0x8] sm:$0xff]
    %v551 = vld [vmem:[%s548 + $0x10] sm:$0xff]
    %v552 = vld [vmem:[%s548 + $0x18] sm:$0xff]
    %v553 = vld [vmem:[%s548 + $0x20] sm:$0xff]
    %v554 = vld [vmem:[%s548 + $0x28] sm:$0xff]
    %v555 = vld [vmem:[%s548 + $0x30] sm:$0xff]
    %v556 = vld [vmem:[%s548 + $0x38] sm:$0xff]
    %v557 = vld [vmem:[%s548 + $0x40] sm:$0xff]
    %v558 = vld [vmem:[%s548 + $0x48] sm:$0xff]
    %v559 = vld [vmem:[%s548 + $0x50] sm:$0xff]
    %v560 = vld [vmem:[%s548 + $0x58] sm:$0xff]
    %v561 = vld [vmem:[%s548 + $0x60] sm:$0xff]
    %v562 = vld [vmem:[%s548 + $0x68] sm:$0xff]
    %v563 = vld [vmem:[%s548 + $0x70] sm:$0xff]
    %v564 = vld [vmem:[%s548 + $0x78] sm:$0xff]
    %v565 = vld [vmem:[%s6 + $0x2] sm:$0x1]
    %v566 = vperm.slane %v565, 0
    %567 = vmatpush.msra.mxu0 %v564
    %568 = vmatpush.msra.mxu0 %v563
    %569 = vmatpush.msra.mxu0 %v562
    %570 = vmatpush.msra.mxu0 %v561
    %571 = vmatpush.msra.mxu0 %v560
    %572 = vmatpush.msra.mxu0 %v559
    %573 = vmatpush.msra.mxu0 %v558
    %574 = vmatpush.msra.mxu0 %v557
    %575 = vmatpush.msra.mxu0 %v556
    %576 = vmatpush.msra.mxu0 %v555
    %577 = vmatpush.msra.mxu0 %v554
    %578 = vmatpush.msra.mxu0 %v553
    %579 = vmatpush.msra.mxu0 %v552
    %580 = vmatpush.msra.mxu0 %v551
    %581 = vmatpush.msra.mxu0 %v550
    %582 = vmatpush.msra.mxu0 %v549
    %583 = vmatmul.f32.gmra.mxu0 %v374
    %v584 = vpop.f32.mrf.mxu0
    %v585 = vadd.f32 %v566, %v584
    %586 = vdwg.mxu0
    %v587 = vmax.f32 %v585, 0.0
    %s588 = scalar_lea.vmem %s7, 256
    %v589 = vld [vmem:[%s588] sm:$0xff]
    %v590 = vld [vmem:[%s588 + $0x8] sm:$0xff]
    %v591 = vld [vmem:[%s588 + $0x10] sm:$0xff]
    %v592 = vld [vmem:[%s588 + $0x18] sm:$0xff]
    %v593 = vld [vmem:[%s588 + $0x20] sm:$0xff]
    %v594 = vld [vmem:[%s588 + $0x28] sm:$0xff]
    %v595 = vld [vmem:[%s588 + $0x30] sm:$0xff]
    %v596 = vld [vmem:[%s588 + $0x38] sm:$0xff]
    %v597 = vld [vmem:[%s588 + $0x40] sm:$0xff]
    %v598 = vld [vmem:[%s588 + $0x48] sm:$0xff]
    %v599 = vld [vmem:[%s588 + $0x50] sm:$0xff]
    %v600 = vld [vmem:[%s588 + $0x58] sm:$0xff]
    %v601 = vld [vmem:[%s588 + $0x60] sm:$0xff]
    %v602 = vld [vmem:[%s588 + $0x68] sm:$0xff]
    %v603 = vld [vmem:[%s588 + $0x70] sm:$0xff]
    %v604 = vld [vmem:[%s588 + $0x78] sm:$0xff]
    %v605 = vld [vmem:[%s8 + $0x2] sm:$0x1]
    %v606 = vperm.slane %v605, 0
    %607 = vmatpush.msra.mxu0 %v604
    %608 = vmatpush.msra.mxu0 %v603
    %609 = vmatpush.msra.mxu0 %v602
    %610 = vmatpush.msra.mxu0 %v601
    %611 = vmatpush.msra.mxu0 %v600
    %612 = vmatpush.msra.mxu0 %v599
    %613 = vmatpush.msra.mxu0 %v598
    %614 = vmatpush.msra.mxu0 %v597
    %615 = vmatpush.msra.mxu0 %v596
    %616 = vmatpush.msra.mxu0 %v595
    %617 = vmatpush.msra.mxu0 %v594
    %618 = vmatpush.msra.mxu0 %v593
    %619 = vmatpush.msra.mxu0 %v592
    %620 = vmatpush.msra.mxu0 %v591
    %621 = vmatpush.msra.mxu0 %v590
    %622 = vmatpush.msra.mxu0 %v589
    %623 = vmatmul.f32.gmra.mxu0 %v587
    %v624 = vpop.f32.mrf.mxu0
    %v625 = vadd.f32 %v606, %v624
    %626 = vdwg.mxu0
    %627 = vst [vmem:[#allocation9] sm:$0x3] %v625
    %628 = vst [vmem:[#allocation9 - $0x3] sm:$0xe0] %v625
    %s629 = scalar_lea.vmem %s5, 384
    %v630 = vld [vmem:[%s629] sm:$0xff]
    %v631 = vld [vmem:[%s629 + $0x8] sm:$0xff]
    %v632 = vld [vmem:[%s629 + $0x10] sm:$0xff]
    %v633 = vld [vmem:[%s629 + $0x18] sm:$0xff]
    %v634 = vld [vmem:[%s629 + $0x20] sm:$0xff]
    %v635 = vld [vmem:[%s629 + $0x28] sm:$0xff]
    %v636 = vld [vmem:[%s629 + $0x30] sm:$0xff]
    %v637 = vld [vmem:[%s629 + $0x38] sm:$0xff]
    %v638 = vld [vmem:[%s629 + $0x40] sm:$0xff]
    %v639 = vld [vmem:[%s629 + $0x48] sm:$0xff]
    %v640 = vld [vmem:[%s629 + $0x50] sm:$0xff]
    %v641 = vld [vmem:[%s629 + $0x58] sm:$0xff]
    %v642 = vld [vmem:[%s629 + $0x60] sm:$0xff]
    %v643 = vld [vmem:[%s629 + $0x68] sm:$0xff]
    %v644 = vld [vmem:[%s629 + $0x70] sm:$0xff]
    %v645 = vld [vmem:[%s629 + $0x78] sm:$0xff]
    %v646 = vld [vmem:[%s6 + $0x3] sm:$0x1]
    %v647 = vperm.slane %v646, 0
    %648 = vmatpush.msra.mxu0 %v645
    %649 = vmatpush.msra.mxu0 %v644
    %650 = vmatpush.msra.mxu0 %v643
    %651 = vmatpush.msra.mxu0 %v642
    %652 = vmatpush.msra.mxu0 %v641
    %653 = vmatpush.msra.mxu0 %v640
    %654 = vmatpush.msra.mxu0 %v639
    %655 = vmatpush.msra.mxu0 %v638
    %656 = vmatpush.msra.mxu0 %v637
    %657 = vmatpush.msra.mxu0 %v636
    %658 = vmatpush.msra.mxu0 %v635
    %659 = vmatpush.msra.mxu0 %v634
    %660 = vmatpush.msra.mxu0 %v633
    %661 = vmatpush.msra.mxu0 %v632
    %662 = vmatpush.msra.mxu0 %v631
    %663 = vmatpush.msra.mxu0 %v630
    %664 = vmatmul.f32.gmra.mxu0 %v374
    %v665 = vpop.f32.mrf.mxu0
    %v666 = vadd.f32 %v647, %v665
    %667 = vdwg.mxu0
    %v668 = vmax.f32 %v666, 0.0
    %s669 = scalar_lea.vmem %s7, 384
    %v670 = vld [vmem:[%s669] sm:$0xff]
    %v671 = vld [vmem:[%s669 + $0x8] sm:$0xff]
    %v672 = vld [vmem:[%s669 + $0x10] sm:$0xff]
    %v673 = vld [vmem:[%s669 + $0x18] sm:$0xff]
    %v674 = vld [vmem:[%s669 + $0x20] sm:$0xff]
    %v675 = vld [vmem:[%s669 + $0x28] sm:$0xff]
    %v676 = vld [vmem:[%s669 + $0x30] sm:$0xff]
    %v677 = vld [vmem:[%s669 + $0x38] sm:$0xff]
    %v678 = vld [vmem:[%s669 + $0x40] sm:$0xff]
    %v679 = vld [vmem:[%s669 + $0x48] sm:$0xff]
    %v680 = vld [vmem:[%s669 + $0x50] sm:$0xff]
    %v681 = vld [vmem:[%s669 + $0x58] sm:$0xff]
    %v682 = vld [vmem:[%s669 + $0x60] sm:$0xff]
    %v683 = vld [vmem:[%s669 + $0x68] sm:$0xff]
    %v684 = vld [vmem:[%s669 + $0x70] sm:$0xff]
    %v685 = vld [vmem:[%s669 + $0x78] sm:$0xff]
    %v686 = vld [vmem:[%s8 + $0x3] sm:$0x1]
    %v687 = vperm.slane %v686, 0
    %688 = vmatpush.msra.mxu0 %v685
    %689 = vmatpush.msra.mxu0 %v684
    %690 = vmatpush.msra.mxu0 %v683
    %691 = vmatpush.msra.mxu0 %v682
    %692 = vmatpush.msra.mxu0 %v681
    %693 = vmatpush.msra.mxu0 %v680
    %694 = vmatpush.msra.mxu0 %v679
    %695 = vmatpush.msra.mxu0 %v678
    %696 = vmatpush.msra.mxu0 %v677
    %697 = vmatpush.msra.mxu0 %v676
    %698 = vmatpush.msra.mxu0 %v675
    %699 = vmatpush.msra.mxu0 %v674
    %700 = vmatpush.msra.mxu0 %v673
    %701 = vmatpush.msra.mxu0 %v672
    %702 = vmatpush.msra.mxu0 %v671
    %703 = vmatpush.msra.mxu0 %v670
    %704 = vmatmul.f32.gmra.mxu0 %v668
    %v705 = vpop.f32.mrf.mxu0
    %v706 = vadd.f32 %v687, %v705
    %707 = vdwg.mxu0
    %708 = vst [vmem:[#allocation10 - $0x2] sm:$0xfc] %v706
    // Predicated region
    $region38: #{mddnet_forward.1} parent=1 // pred_check
      _
    $region39: #{mddnet_forward.1} parent=1 // pred_check_branch
      %710 = sbr.rel (0) target = $region41
    $region40: #{mddnet_forward.1} parent=1 // pred_region
      %712 = vsyncadd [#allocation3], 0
      %s714 = sshll.u32 [#allocation2], 4
      %s715 = int_to_ptr.vmem [resolvable:$true] %s714
      %s716 = sshll.u32 %s9, 4
      %s717 = int_to_ptr.hbm [resolvable:$true] %s716
      %719 = dma.vmem_to_hbm [thread:$0]  %s715, 128, %s717, [#allocation3]
    $region41: #{mddnet_forward.1} parent=1 // pred_fallthru
      _
    // Predicated region
    $region42: #{mddnet_forward.1} parent=1 // pred_check
      _
    $region43: #{mddnet_forward.1} parent=1 // pred_check_branch
      %721 = sbr.rel (0) target = $region45
    $region44: #{mddnet_forward.1} parent=1 // pred_region
      %723 = vsyncadd [#allocation5], 0
      %s725 = sshll.u32 [#allocation4], 4
      %s726 = int_to_ptr.vmem [resolvable:$true] %s725
      %s727 = sshll.u32 %s10, 4
      %s728 = int_to_ptr.hbm [resolvable:$true] %s727
      %730 = dma.vmem_to_hbm [thread:$0]  %s726, 128, %s728, [#allocation5]
    $region45: #{mddnet_forward.1} parent=1 // pred_fallthru
      _
    // Predicated region
    $region46: #{mddnet_forward.1} parent=1 // pred_check
      _
    $region47: #{mddnet_forward.1} parent=1 // pred_check_branch
      %732 = sbr.rel (0) target = $region49
    $region48: #{mddnet_forward.1} parent=1 // pred_region
      %734 = vsyncadd [#allocation5], 0
      %s736 = sshll.u32 [#allocation6], 4
      %s737 = int_to_ptr.vmem [resolvable:$true] %s736
      %s738 = sshll.u32 %s11, 4
      %s739 = int_to_ptr.hbm [resolvable:$true] %s738
      %741 = dma.vmem_to_hbm [thread:$0]  %s737, 128, %s739, [#allocation5]
    $region49: #{mddnet_forward.1} parent=1 // pred_fallthru
      _
    // Predicated region
    $region50: #{mddnet_forward.1} parent=1 // pred_check
      _
    $region51: #{mddnet_forward.1} parent=1 // pred_check_branch
      %743 = sbr.rel (0) target = $region53
    $region52: #{mddnet_forward.1} parent=1 // pred_region
      %745 = vsyncadd [#allocation8], 0
      %s747 = sshll.u32 [#allocation7], 4
      %s748 = int_to_ptr.vmem [resolvable:$true] %s747
      %s749 = sshll.u32 %s12, 4
      %s750 = int_to_ptr.hbm [resolvable:$true] %s749
      %752 = dma.vmem_to_hbm [thread:$0]  %s748, 128, %s750, [#allocation8]
    $region53: #{mddnet_forward.1} parent=1 // pred_fallthru
      _
    // Predicated region
    $region54: #{mddnet_forward.1} parent=1 // pred_check
      _
    $region55: #{mddnet_forward.1} parent=1 // pred_check_branch
      %754 = sbr.rel (0) target = $region57
    $region56: #{mddnet_forward.1} parent=1 // pred_region
      %756 = vsyncadd [#allocation8], 0
      %s758 = sshll.u32 [#allocation9], 4
      %s759 = int_to_ptr.vmem [resolvable:$true] %s758
      %s760 = sshll.u32 %s13, 4
      %s761 = int_to_ptr.hbm [resolvable:$true] %s760
      %763 = dma.vmem_to_hbm [thread:$0]  %s759, 128, %s761, [#allocation8]
    $region57: #{mddnet_forward.1} parent=1 // pred_fallthru
      _
    // Predicated region
    $region58: #{mddnet_forward.1} parent=1 // pred_check
      _
    $region59: #{mddnet_forward.1} parent=1 // pred_check_branch
      %765 = sbr.rel (0) target = $region61
    $region60: #{mddnet_forward.1} parent=1 // pred_region
      %767 = vsyncadd [#allocation11], 0
      %s769 = sshll.u32 [#allocation10], 4
      %s770 = int_to_ptr.vmem [resolvable:$true] %s769
      %s771 = sshll.u32 %s14, 4
      %s772 = int_to_ptr.hbm [resolvable:$true] %s771
      %774 = dma.vmem_to_hbm [thread:$0]  %s770, 128, %s772, [#allocation11]
    $region61: #{mddnet_forward.1} parent=1 // pred_fallthru
      _
    // Predicated region
    $region62: #{mddnet_forward.1} parent=1 // pred_check
      _
    $region63: #{mddnet_forward.1} parent=1 // pred_check_branch
      %776 = sbr.rel (0) target = $region65
    $region64: #{mddnet_forward.1} parent=1 // pred_region
      %778 = dma.done [#allocation3], 128
    $region65: #{mddnet_forward.1} parent=1 // pred_fallthru
      _
    // Predicated region
    $region66: #{mddnet_forward.1} parent=1 // pred_check
      _
    $region67: #{mddnet_forward.1} parent=1 // pred_check_branch
      %780 = sbr.rel (0) target = $region69
    $region68: #{mddnet_forward.1} parent=1 // pred_region
      %782 = dma.done [#allocation5], 128
    $region69: #{mddnet_forward.1} parent=1 // pred_fallthru
      _
    // Predicated region
    $region70: #{mddnet_forward.1} parent=1 // pred_check
      _
    $region71: #{mddnet_forward.1} parent=1 // pred_check_branch
      %784 = sbr.rel (0) target = $region73
    $region72: #{mddnet_forward.1} parent=1 // pred_region
      %786 = dma.done [#allocation5], 128
    $region73: #{mddnet_forward.1} parent=1 // pred_fallthru
      _
    // Predicated region
    $region74: #{mddnet_forward.1} parent=1 // pred_check
      _
    $region75: #{mddnet_forward.1} parent=1 // pred_check_branch
      %788 = sbr.rel (0) target = $region77
    $region76: #{mddnet_forward.1} parent=1 // pred_region
      %790 = dma.done [#allocation8], 128
    $region77: #{mddnet_forward.1} parent=1 // pred_fallthru
      _
    // Predicated region
    $region78: #{mddnet_forward.1} parent=1 // pred_check
      _
    $region79: #{mddnet_forward.1} parent=1 // pred_check_branch
      %792 = sbr.rel (0) target = $region81
    $region80: #{mddnet_forward.1} parent=1 // pred_region
      %794 = dma.done [#allocation8], 128
    $region81: #{mddnet_forward.1} parent=1 // pred_fallthru
      _
    // Predicated region
    $region82: #{mddnet_forward.1} parent=1 // pred_check
      _
    $region83: #{mddnet_forward.1} parent=1 // pred_check_branch
      %796 = sbr.rel (0) target = $region85
    $region84: #{mddnet_forward.1} parent=1 // pred_region
      %798 = dma.done [#allocation11], 128
    $region85: #{mddnet_forward.1} parent=1 // pred_fallthru
      _
    %799 = vsyncpa [#allocation3], 1
    %800 = vsyncpa [#allocation5], 1
    %801 = vsyncpa [#allocation8], 1
    %802 = vsyncpa [#allocation11], 1

</llo_original>
